<compile_context>
chip_gen: v7x
topology: tpu7x:2x2x1
jax: 0.10.0
libtpu: 0.0.40
codegen_flags: <defaults>
</compile_context>

<pallas_src>
import functools

import jax
import jax.numpy as jnp
from jax import lax
from jax.experimental import pallas as pl
from jax.experimental.pallas import tpu as pltpu

LANES = 128
SUBLANES = 8
ALIGN = SUBLANES * LANES          # 1024: kernel prefix granularity
DEFAULT_MAX_BLOCK_ROWS = 4096     # (4096,128) f32 tile = 2 MiB; 2 in x 2 buf = 8 MiB


def _round_up(x, m):
    return ((x + m - 1) // m) * m


def _num_tensorcores():
    # Use both TensorCores only on multi-TC chips (v7x); on v5e/v6e the extra
    # grid axis would just be a serial outer loop.
    try:
        kind = jax.devices()[0].device_kind.lower()
    except Exception:
        return 1
    return 2 if ("v7" in kind or "7x" in kind) else 1


def _focal_terms(x, t, gamma):
    """Stable BCE-with-logits focal terms (no alpha), f32 in / f32 out."""
    loss = jnp.maximum(x, 0.0) - x * t + jnp.log1p(jnp.exp(-jnp.abs(x)))
    pt = jnp.exp(-loss)
    omp = 1.0 - pt
    g = float(gamma)
    if g == 0.0:
        return loss
    if g.is_integer() and 1.0 <= g <= 8.0:
        w = omp                               # start at omp: gamma-1 extra muls
        for _ in range(int(g) - 1):
            w = w * omp
        return w * loss
    # TODO(synk): non-integer gamma falls back to pow (clamped to avoid log(0));
    # diverges from torch only for negative non-integer gamma (edge case).
    return jnp.power(jnp.maximum(omp, jnp.float32(1e-30)), jnp.float32(g)) * loss


def _focal_loss_kernel(x_ref, t_ref, out_ref, *, gamma, rem_rows):
    i = pl.program_id(1)                      # sequential block axis ("arbitrary")

    @pl.when(i == 0)
    def _():
        out_ref[...] = jnp.zeros_like(out_ref)

    x = x_ref[...].astype(jnp.float32)
    t = t_ref[...].astype(jnp.float32)
    focal = _focal_terms(x, t, gamma)

    def _accum(vals):
        # (block_rows,128) -> (block_rows//8, 8, 128): tile-aligned reshape;
        # sum over axis 0 is pure VPU adds into one vreg-sized accumulator.
        out_ref[0] += vals.reshape(-1, SUBLANES, LANES).sum(axis=0)

    if rem_rows:
        # Only the globally-last block is partial; gate the mask to it so every
        # other grid step runs mask-free.
        is_tail = jnp.logical_and(pl.program_id(0) == pl.num_programs(0) - 1,
                                  i == pl.num_programs(1) - 1)

        @pl.when(jnp.logical_not(is_tail))
        def _():
            _accum(focal)

        @pl.when(is_tail)
        def _():
            row = lax.broadcasted_iota(jnp.int32, focal.shape, 0)
            _accum(jnp.where(row < rem_rows, focal, 0.0))
    else:
        _accum(focal)


def focal_loss(inputs, targets, alpha=1.0, gamma=2.0, *,
               max_block_rows=DEFAULT_MAX_BLOCK_ROWS, ncores=None):
    """Mean focal loss over all elements. inputs/targets: same shape, any dtype."""
    assert inputs.shape == targets.shape
    n = int(inputs.size)
    assert n > 0

    flat_x = inputs.reshape(-1)
    flat_t = targets.reshape(-1)

    n_main = (n // ALIGN) * ALIGN             # kernel handles this prefix
    tail = n - n_main                         # < 1024 elems, handled in wrapper

    total = jnp.float32(0.0)

    if n_main:
        if tail:
            # TODO(synk): prefix slice materializes a copy for non-1024-aligned
            # sizes; aligned sizes (the common case) hit the free-reshape path.
            x_main = flat_x[:n_main]
            t_main = flat_t[:n_main]
        else:
            x_main, t_main = flat_x, flat_t

        rows = n_main // LANES                # multiple of 8 by construction
        x2 = x_main.reshape(rows, LANES)
        t2 = t_main.reshape(rows, LANES)

        max_rows = max(SUBLANES, _round_up(int(max_block_rows), SUBLANES))
        block_rows = min(max_rows, rows)
        num_blocks = pl.cdiv(rows, block_rows)

        # Split across TensorCores only when the block count divides exactly
        # (no clamped / duplicated blocks, no wasted DMA, no extra masking).
        ncores_req = int(ncores) if ncores is not None else _num_tensorcores()
        nc = 1
        if ncores_req > 1:
            k_hi = pl.cdiv(num_blocks, ncores_req)
            for k in range(k_hi, max(k_hi - 4, 0), -1):
                target = ncores_req * k
                br = _round_up(pl.cdiv(rows, target), SUBLANES)
                if br <= block_rows and pl.cdiv(rows, br) == target:
                    nc, block_rows, num_blocks = ncores_req, br, target
                    break
        blocks_per_core = num_blocks // nc
        rem_rows = rows % block_rows          # valid rows in the last block (0 = full)

        kernel = functools.partial(_focal_loss_kernel,
                                   gamma=float(gamma), rem_rows=rem_rows)

        in_spec = pl.BlockSpec((block_rows, LANES),
                               lambda c, i: (c * blocks_per_core + i, 0))
        partials = pl.pallas_call(
            kernel,
            out_shape=jax.ShapeDtypeStruct((nc, SUBLANES, LANES), jnp.float32),
            grid=(nc, blocks_per_core),
            in_specs=[in_spec, in_spec],
            out_specs=pl.BlockSpec((1, SUBLANES, LANES), lambda c, i: (c, 0, 0)),
            compiler_params=pltpu.CompilerParams(
                dimension_semantics=("parallel", "arbitrary")),
        )(x2, t2)
        total = total + jnp.sum(partials, dtype=jnp.float32)

    if tail:
        xt = flat_x[n_main:].astype(jnp.float32)
        tt = flat_t[n_main:].astype(jnp.float32)
        total = total + jnp.sum(_focal_terms(xt, tt, gamma), dtype=jnp.float32)

    # alpha and the mean are one scalar op on the result (not the pre-scale
    # anti-pattern: nothing tensor-sized is touched here).
    return total * (jnp.float32(alpha) / jnp.float32(n))


def _focal_loss_ref(inputs, targets, alpha=1.0, gamma=2.0):
    x = inputs.astype(jnp.float32)
    t = targets.astype(jnp.float32)
    loss = jnp.maximum(x, 0.0) - x * t + jnp.log1p(jnp.exp(-jnp.abs(x)))
    pt = jnp.exp(-loss)
    return jnp.mean(alpha * (1.0 - pt) ** gamma * loss)


if __name__ == "__main__":
    key = jax.random.PRNGKey(0)
    ks = jax.random.split(key, 8)

    def check(x, t, alpha, gamma, **kw):
        out = jax.block_until_ready(focal_loss(x, t, alpha=alpha, gamma=gamma, **kw))
        ref = _focal_loss_ref(x, t, alpha=alpha, gamma=gamma)
        assert jnp.allclose(out, ref, atol=1e-5, rtol=1e-5), (out, ref)

    # 1) 1024-aligned NCHW (PyTorch segmentation-style): pure kernel path,
    #    no copies, no masks.
    x1 = jax.random.normal(ks[0], (2, 4, 16, 16), dtype=jnp.float32)
    t1 = (jax.random.uniform(ks[1], (2, 4, 16, 16)) > 0.5).astype(jnp.float32)
    check(x1, t1, 1.0, 2.0)

    # 2) non-aligned shape: aligned prefix in kernel + tiny jnp tail in wrapper.
    x2 = jax.random.normal(ks[2], (2, 3, 17, 19), dtype=jnp.float32)
    t2 = (jax.random.uniform(ks[3], (2, 3, 17, 19)) > 0.5).astype(jnp.float32)
    check(x2, t2, 0.75, 2.0)

    # 3) forced 2-way core split + partial (pl.when-masked) tail block.
    x3 = jax.random.normal(ks[4], (3, 8, 128), dtype=jnp.float32)
    t3 = (jax.random.uniform(ks[5], (3, 8, 128)) > 0.5).astype(jnp.float32)
    check(x3, t3, 1.0, 3.0, ncores=2, max_block_rows=16)

    # 4) multi-block sequential accumulation + narrow-dtype (bf16) targets.
    x4 = jax.random.normal(ks[6], (2, 4, 64, 64), dtype=jnp.float32)
    t4 = (jax.random.uniform(ks[7], (2, 4, 64, 64)) > 0.5).astype(jnp.bfloat16)
    check(x4, t4, 1.0, 2.0, max_block_rows=64)

    print("KERNEL_OK")
</pallas_src>

<mosaic_0001>
module attributes {stable_mosaic.version = 11 : i64} {
  func.func @_focal_loss_kernel(%arg0: i32, %arg1: i32, %arg2: memref<16x128xf32, #tpu.memory_space<vmem>>, %arg3: memref<16x128xf32, #tpu.memory_space<vmem>>, %arg4: memref<1x8x128xf32, #tpu.memory_space<vmem>>) attributes {dimension_semantics = [#tpu.dimension_semantics<parallel>, #tpu.dimension_semantics<arbitrary>], iteration_bounds = array<i64: 1, 1>, scalar_prefetch = 0 : i64, scratch_operands = 0 : i64, tpu.core_type = #tpu.core_type<tc>, window_params = [{transform_indices = @transform_0, window_bounds = array<i64: 16, 128>}, {transform_indices = @transform_1, window_bounds = array<i64: 16, 128>}, {transform_indices = @transform_2, window_bounds = array<i64: 1, 8, 128>}]} {
    %c0_i32 = arith.constant 0 : i32
    %0 = arith.cmpi eq, %arg1, %c0_i32 : i32
    %1 = arith.extui %0 : i1 to i32
    %c0_i32_0 = arith.constant 0 : i32
    %2 = arith.cmpi ne, %1, %c0_i32_0 : i32
    scf.if %2 {
      %cst_14 = arith.constant 0.000000e+00 : f32
      %30 = vector.broadcast %cst_14 : f32 to vector<1x8x128xf32>
      %c0_15 = arith.constant 0 : index
      %c0_16 = arith.constant 0 : index
      %c0_17 = arith.constant 0 : index
      %31 = vector.load %arg4[%c0_15, %c0_16, %c0_17] : memref<1x8x128xf32, #tpu.memory_space<vmem>>, vector<1x8x128xf32>
      tpu.vector_store %arg4[%c0_15, %c0_16, %c0_17], %30 {strides = array<i32>} : memref<1x8x128xf32, #tpu.memory_space<vmem>>, vector<1x8x128xf32>,
    } else {
    }
    %c0 = arith.constant 0 : index
    %c0_1 = arith.constant 0 : index
    %3 = vector.load %arg2[%c0, %c0_1] : memref<16x128xf32, #tpu.memory_space<vmem>>, vector<16x128xf32>
    %c0_2 = arith.constant 0 : index
    %c0_3 = arith.constant 0 : index
    %4 = vector.load %arg3[%c0_2, %c0_3] : memref<16x128xf32, #tpu.memory_space<vmem>>, vector<16x128xf32>
    %cst = arith.constant 0.000000e+00 : f32
    %5 = vector.broadcast %cst : f32 to vector<16x128xf32>
    %6 = arith.maximumf %3, %5 : vector<16x128xf32>
    %7 = arith.mulf %3, %4 : vector<16x128xf32>
    %8 = arith.subf %6, %7 : vector<16x128xf32>
    %9 = math.absf %3 : vector<16x128xf32>
    %cst_4 = arith.constant 0.000000e+00 : f32
    %10 = vector.broadcast %cst_4 : f32 to vector<16x128xf32>
    %11 = arith.subf %10, %9 : vector<16x128xf32>
    %12 = math.exp %11 : vector<16x128xf32>
    %13 = math.log1p %12 : vector<16x128xf32>
    %14 = arith.addf %8, %13 : vector<16x128xf32>
    %cst_5 = arith.constant 0.000000e+00 : f32
    %15 = vector.broadcast %cst_5 : f32 to vector<16x128xf32>
    %16 = arith.subf %15, %14 : vector<16x128xf32>
    %17 = math.exp %16 : vector<16x128xf32>
    %cst_6 = arith.constant 1.000000e+00 : f32
    %18 = vector.broadcast %cst_6 : f32 to vector<16x128xf32>
    %19 = arith.subf %18, %17 : vector<16x128xf32>
    %20 = arith.mulf %19, %19 : vector<16x128xf32>
    %21 = arith.mulf %20, %14 : vector<16x128xf32>
    %c0_7 = arith.constant 0 : index
    %c0_8 = arith.constant 0 : index
    %c0_9 = arith.constant 0 : index
    %22 = vector.load %arg4[%c0_7, %c0_8, %c0_9] : memref<1x8x128xf32, #tpu.memory_space<vmem>>, vector<1x8x128xf32>
    %23 = vector.shape_cast %22 : vector<1x8x128xf32> to vector<8x128xf32>
    %24 = vector.shape_cast %21 : vector<16x128xf32> to vector<2x8x128xf32>
    %cst_10 = arith.constant dense<0.000000e+00> : vector<8x128xf32>
    %25 = vector.multi_reduction <add>, %24, %cst_10 [0] : vector<2x8x128xf32> to vector<8x128xf32>
    %26 = arith.addf %23, %25 : vector<8x128xf32>
    %c0_11 = arith.constant 0 : index
    %c0_12 = arith.constant 0 : index
    %c0_13 = arith.constant 0 : index
    %27 = vector.load %arg4[%c0_11, %c0_12, %c0_13] : memref<1x8x128xf32, #tpu.memory_space<vmem>>, vector<1x8x128xf32>
    %28 = vector.shape_cast %27 : vector<1x8x128xf32> to vector<8x128xf32>
    %29 = vector.shape_cast %26 : vector<8x128xf32> to vector<1x8x128xf32>
    tpu.vector_store %arg4[%c0_11, %c0_12, %c0_13], %29 {strides = array<i32>} : memref<1x8x128xf32, #tpu.memory_space<vmem>>, vector<1x8x128xf32>,
    return
  }
  func.func @transform_0(%arg0: i32, %arg1: i32) -> (i32, i32) {
    %c1_i32 = arith.constant 1 : i32
    %0 = arith.muli %arg0, %c1_i32 : i32
    %1 = arith.addi %0, %arg1 : i32
    %c0_i32 = arith.constant 0 : i32
    %c0_i32_0 = arith.constant 0 : i32
    return %1, %c0_i32 : i32, i32
  }
  func.func @transform_1(%arg0: i32, %arg1: i32) -> (i32, i32) {
    %c1_i32 = arith.constant 1 : i32
    %0 = arith.muli %arg0, %c1_i32 : i32
    %1 = arith.addi %0, %arg1 : i32
    %c0_i32 = arith.constant 0 : i32
    %c0_i32_0 = arith.constant 0 : i32
    return %1, %c0_i32 : i32, i32
  }
  func.func @transform_2(%arg0: i32, %arg1: i32) -> (i32, i32, i32) {
    %c0_i32 = arith.constant 0 : i32
    %c0_i32_0 = arith.constant 0 : i32
    %c0_i32_1 = arith.constant 0 : i32
    return %arg0, %c0_i32, %c0_i32_0 : i32, i32, i32
  }
}

</mosaic_0001>

<llo_original>
// kernel: tpu_custom_call.1
$region0: #{tpu_custom_call.1}
  #allocation0 [shape = 'u32[]', space=smem, size = 0x4, offset = 0x4, fixed_abs, tag = 'smem constant byte address 0x4 - core index']
  #allocation1 [shape = 'u32[144,128]{1,0:T(1,128)}', space=vmem, size = 0x12000, scoped, tag = 'internal scratch']
  %s0 = inlined_call_operand.hbm [shape: f32[16,128], index: 0, kind: input, shape index: {}]
  %s1 = inlined_call_operand.hbm [shape: f32[16,128], index: 1, kind: input, shape index: {}]
  %s2 = inlined_call_operand.hbm [shape: f32[1,8,128], index: 2, kind: output, shape index: {}]
  %s3 = sld [smem:[#allocation0]]
  $region30: #{tpu_custom_call.1} parent=0
    _
  %s5 = ssub.s32 1, %s3
  %s6 = scalar_select 0, %s5, %s3
  $region1: #{tpu_custom_call.1} parent=0
    #allocation2 [shape = 'u8[8192]{0}', space=vmem, size = 0x2000, scoped, tag = 'input window, operand 0, single buffered']
    #allocation3 [shape = 's32[1]{0}', space=sflag, size = 0x4, scoped, tag = 'scoped memory for tpu_custom_call.1']
    #allocation4 [shape = 's32[1]{0}', space=sflag, size = 0x4, scoped, tag = 'scoped memory for tpu_custom_call.1']
    #allocation5 [shape = 'u8[8192]{0}', space=vmem, size = 0x2000, scoped, tag = 'input window, operand 1, single buffered']
    #allocation6 [shape = 's32[1]{0}', space=sflag, size = 0x4, scoped, tag = 'scoped memory for tpu_custom_call.1']
    #allocation7 [shape = 'u8[4096]{0}', space=vmem, size = 0x1000, scoped, tag = 'output window, operand 0, single buffered']
    %7 = vsyncpa [#allocation3], 0
    %8 = vsyncpa [#allocation6], 0
    %9 = vsyncpa [#allocation4], 0
    // Predicated region
    $region2: #{tpu_custom_call.1} parent=1 // pred_check
      _
    $region3: #{tpu_custom_call.1} parent=1 // pred_check_branch
      %11 = sbr.rel (0) target = $region5
    $region4: #{tpu_custom_call.1} parent=1 // pred_region
      %s12 = sadd.s32 0, 0
      %s13 = smul.u32 2, %s12
      %s15 = ssub.s32 256, 256
      %16 = vsyncadd [#allocation3], %s15
      %s17 = smul.addr %s13, 128
      %s18 = scalar_lea.hbm %s0, %s17
      %s19 = sshll.u32 [#allocation2], 4
      %s20 = int_to_ptr.vmem [resolvable:$true] %s19
      %25 = dma.hbm_to_vmem [thread:$0]  %s18, 256, %s20, [#allocation3], 128, 128, 8
    $region5: #{tpu_custom_call.1} parent=1 // pred_fallthru
      _
    // Predicated region
    $region6: #{tpu_custom_call.1} parent=1 // pred_check
      _
    $region7: #{tpu_custom_call.1} parent=1 // pred_check_branch
      %27 = sbr.rel (0) target = $region9
    $region8: #{tpu_custom_call.1} parent=1 // pred_region
      %s28 = sadd.s32 0, 0
      %s29 = smul.u32 2, %s28
      %s31 = ssub.s32 256, 256
      %32 = vsyncadd [#allocation6], %s31
      %s33 = smul.addr %s29, 128
      %s34 = scalar_lea.hbm %s1, %s33
      %s35 = sshll.u32 [#allocation5], 4
      %s36 = int_to_ptr.vmem [resolvable:$true] %s35
      %41 = dma.hbm_to_vmem [thread:$0]  %s34, 256, %s36, [#allocation6], 128, 128, 8
    $region9: #{tpu_custom_call.1} parent=1 // pred_fallthru
      _
    // Predicated region
    $region10: #{tpu_custom_call.1} parent=1 // pred_check
      _
    $region11: #{tpu_custom_call.1} parent=1 // pred_check_branch
      %43 = sbr.rel (0) target = $region13
    $region12: #{tpu_custom_call.1} parent=1 // pred_region
      %44 = dma.done [#allocation3], 256
    $region13: #{tpu_custom_call.1} parent=1 // pred_fallthru
      _
    // Predicated region
    $region14: #{tpu_custom_call.1} parent=1 // pred_check
      _
    $region15: #{tpu_custom_call.1} parent=1 // pred_check_branch
      %46 = sbr.rel (0) target = $region17
    $region16: #{tpu_custom_call.1} parent=1 // pred_region
      %47 = dma.done [#allocation6], 256
    $region17: #{tpu_custom_call.1} parent=1 // pred_fallthru
      _
    %s48 = sadd.s32 0, 0
    %s49 = smul.u32 2, %s48
    %s50 = sadd.s32 0, 0
    %s51 = smul.u32 2, %s50
    %p52 = scmp.eq.s32.totalorder 0, 0
    // Predicated region
    $region18: #{tpu_custom_call.1} parent=1 // pred_check
      %p53 = pneg %p52
    $region19: #{tpu_custom_call.1} parent=1 // pred_check_branch
      %55 = sbr.rel (%p53) target = $region21
    $region20: #{tpu_custom_call.1} parent=1 // pred_region
      %56 = vst [vmem:[#allocation7] sm:$0xff] 0.0
    $region21: #{tpu_custom_call.1} parent=1 // pred_fallthru
      _
    %v57 = vld [vmem:[#allocation2] sm:$0xff]
    %v58 = vld [vmem:[#allocation2 + $0x8] sm:$0xff]
    %v59 = vld [vmem:[#allocation5] sm:$0xff]
    %v60 = vld [vmem:[#allocation5 + $0x8] sm:$0xff]
    %v61 = vmax.f32 %v57, 0.0
    %v62 = vmax.f32 %v58, 0.0
    %v63 = vmul.f32 %v57, %v59
    %v64 = vmul.f32 %v58, %v60
    %v65 = vsub.f32 %v61, %v63
    %v66 = vsub.f32 %v62, %v64
    %v67 = vand.u32 2147483647, %v57
    %v68 = vand.u32 2147483647, %v58
    %v69 = vsub.f32 0.0, %v67
    %v70 = vsub.f32 0.0, %v68
    %v71 = vmul.f32 %v69, 1.442695
    %v72 = vpow.pop %v71
    %v73 = vmul.f32 %v70, 1.442695
    %v74 = vpow.pop %v73
    %v75 = vadd.f32 %v72, 1.0
    %v76 = vlog2.pop %v75
    %v77 = vmul.f32 %v76, 0.6931472
    %v78 = vmul.f32 -0.5, %v72
    %v79 = vadd.f32 %v78, 1.0
    %v80 = vmul.f32 %v79, %v72
    %v81 = vand.u32 2147483647, %v72
    %vm82 = vcmp.lt.f32.partialorder %v81, 0.0004427343
    %v83 = vsel %vm82, %v80, %v77
    %v84 = vadd.f32 %v74, 1.0
    %v85 = vlog2.pop %v84
    %v86 = vmul.f32 %v85, 0.6931472
    %v87 = vmul.f32 -0.5, %v74
    %v88 = vadd.f32 %v87, 1.0
    %v89 = vmul.f32 %v88, %v74
    %v90 = vand.u32 2147483647, %v74
    %vm91 = vcmp.lt.f32.partialorder %v90, 0.0004427343
    %v92 = vsel %vm91, %v89, %v86
    %v93 = vadd.f32 %v65, %v83
    %v94 = vadd.f32 %v66, %v92
    %v95 = vsub.f32 0.0, %v93
    %v96 = vsub.f32 0.0, %v94
    %v97 = vmul.f32 %v95, 1.442695
    %v98 = vpow.pop %v97
    %v99 = vmul.f32 %v96, 1.442695
    %v100 = vpow.pop %v99
    %v101 = vsub.f32 1.0, %v98
    %v102 = vsub.f32 1.0, %v100
    %v103 = vmul.f32 %v101, %v101
    %v104 = vmul.f32 %v102, %v102
    %v105 = vmul.f32 %v103, %v93
    %v106 = vmul.f32 %v104, %v94
    %v107 = vld [vmem:[#allocation7] sm:$0xff]
    %v108 = vadd.f32 %v105, %v106
    %v109 = vadd.f32 %v107, %v108
    %110 = vst [vmem:[#allocation7] sm:$0xff] %v109
    // Predicated region
    $region22: #{tpu_custom_call.1} parent=1 // pred_check
      _
    $region23: #{tpu_custom_call.1} parent=1 // pred_check_branch
      %112 = sbr.rel (0) target = $region25
    $region24: #{tpu_custom_call.1} parent=1 // pred_region
      %s114 = ssub.s32 128, 128
      %115 = vsyncadd [#allocation4], %s114
      %s117 = sshll.u32 [#allocation7], 4
      %s118 = int_to_ptr.vmem [resolvable:$true] %s117
      %120 = dma.vmem_to_hbm [thread:$0]  %s118, 128, %s2, [#allocation4]
    $region25: #{tpu_custom_call.1} parent=1 // pred_fallthru
      _
    // Predicated region
    $region26: #{tpu_custom_call.1} parent=1 // pred_check
      _
    $region27: #{tpu_custom_call.1} parent=1 // pred_check_branch
      %122 = sbr.rel (0) target = $region29
    $region28: #{tpu_custom_call.1} parent=1 // pred_region
      %123 = dma.done [#allocation4], 128
    $region29: #{tpu_custom_call.1} parent=1 // pred_fallthru
      _
    %124 = vsyncpa [#allocation3], 1
    %125 = vsyncpa [#allocation6], 1
    %126 = vsyncpa [#allocation4], 1

</llo_original>
